<compile_context>
chip_gen: v5e
topology: v5e:2x2
jax: 0.10.0
libtpu: 0.0.40
codegen_flags: <defaults>
</compile_context>

<pallas_src>
import functools

import jax
import jax.numpy as jnp
import numpy as np
from jax.experimental import pallas as pl
from jax.experimental.pallas import tpu as pltpu


def _round_up(v, m):
    return (v + m - 1) // m * m


# ----------------------------------------------------------------------------
# Fused kernel: grid = (num_layers,), h kept resident in VMEM scratch
# ----------------------------------------------------------------------------

def _net2_kernel(x_ref, mask_ref, emb_ref, w0_ref, b0_ref, adj_ref,
                 convw_ref, convb_ref, ltw_ref, ltb_ref,
                 out_ref, h_ref, *, num_graphs):
    layer = pl.program_id(0)
    num_layers = pl.num_programs(0)
    cdtype = x_ref.dtype                      # matmul operand dtype (f32 or bf16)

    # ---- grid step 0: stage-1 per-graph meta-weighted feature transform -----
    @pl.when(layer == 0)
    def _stage1():
        w0 = w0_ref[...]                      # (F_pad, 1)      f32
        b0 = b0_ref[...]                      # (F_pad, H_pad)  f32
        x = x_ref[...]                        # (N_pad, F_pad)  cdtype
        acc = jnp.zeros(h_ref.shape, jnp.float32)
        for g in range(num_graphs):           # static unroll, G is small
            emb_g = emb_ref[pl.ds(g, 1), :]   # (1, H_pad) f32
            # outer product done on the VPU (broadcast), not a K=1 MXU matmul
            new_w0 = jnp.maximum(w0 * emb_g + b0, 0.0)
            h_g = jnp.dot(x, new_w0.astype(cdtype),
                          preferred_element_type=jnp.float32)   # (N_pad, H_pad)
            acc = acc + mask_ref[g] * h_g      # one-hot graph mask (N_pad, 1)
        h_ref[...] = acc

    # ---- every grid step: one GCN layer  h <- relu(adj @ (h @ W_l) + b_l) ---
    w_l = convw_ref[0]                         # (H_pad, H_pad)  cdtype
    b_l = convb_ref[0]                         # (1, H_pad)      f32
    hw = jnp.dot(h_ref[...].astype(cdtype), w_l,
                 preferred_element_type=jnp.float32)
    agg = jnp.dot(adj_ref[...], hw.astype(cdtype),
                  preferred_element_type=jnp.float32)
    h_ref[...] = jnp.maximum(agg + b_l, 0.0)
    # TODO(synk): F.dropout(training=self.training) is identity in eval mode;
    # training-time dropout would use pltpu.prng_seed / pltpu.prng_random_bits.

    # ---- last grid step: linear head + log_softmax (padded classes masked) --
    @pl.when(layer == num_layers - 1)
    def _head():
        z = jnp.dot(h_ref[...].astype(cdtype), ltw_ref[...],
                    preferred_element_type=jnp.float32) + ltb_ref[...]
        m = jnp.max(z, axis=1, keepdims=True)
        lse = jnp.log(jnp.sum(jnp.exp(z - m), axis=1, keepdims=True)) + m
        out_ref[...] = z - lse


# ----------------------------------------------------------------------------
# Wrapper: padding / packing + single pallas_call
# ----------------------------------------------------------------------------

@functools.partial(jax.jit, static_argnames=("compute_dtype",))
def net2_forward(params, x, adj, E_meta, ptr, *, compute_dtype=jnp.float32):
    """Fused Pallas implementation of Net2.forward (eval mode).

    `adj` is the dense symmetric-normalized adjacency (built once outside)."""
    N, F = x.shape
    G, H = E_meta.shape
    C = params["lt1_b"].shape[0]
    L = len(params["conv"])
    assert L >= 1

    N_pad = _round_up(N, 8)
    F_pad = _round_up(F, 128)
    H_pad = _round_up(H, 128)
    C_pad = _round_up(C, 128)

    def pad2(a, s0, s1):
        return jnp.pad(a, ((0, s0 - a.shape[0]), (0, s1 - a.shape[1])))

    # matmul operands in compute_dtype (bf16 on v6e/v7x), elementwise params f32
    x_p = pad2(x, N_pad, F_pad).astype(compute_dtype)
    adj_p = pad2(adj, N_pad, N_pad).astype(compute_dtype)
    w0_p = pad2(params["w0"], F_pad, 1)                                 # f32
    b0_p = pad2(params["b0"], F_pad, H_pad)                             # f32
    emb_p = pad2(E_meta, G, H_pad)                                      # f32
    convw = jnp.stack([w for (w, _) in params["conv"]])                 # (L,H,H)
    convw_p = jnp.pad(convw, ((0, 0), (0, H_pad - H), (0, H_pad - H))
                      ).astype(compute_dtype)
    convb = jnp.stack([b for (_, b) in params["conv"]])                 # (L,H)
    convb_p = jnp.pad(convb, ((0, 0), (0, H_pad - H)))[:, None, :]      # (L,1,H_pad)
    ltw_p = pad2(params["lt1_w"], H_pad, C_pad).astype(compute_dtype)
    # padded class columns get a huge negative bias -> zero softmax weight
    ltb_p = jnp.full((1, C_pad), -1e30, jnp.float32).at[0, :C].set(params["lt1_b"])

    # one-hot graph membership mask (G, N_pad, 1) built from ptr
    node = jnp.arange(N_pad, dtype=jnp.int32)[None, :]
    lo = ptr[:-1].astype(jnp.int32)[:, None]
    hi = ptr[1:].astype(jnp.int32)[:, None]
    mask = ((node >= lo) & (node < hi)).astype(jnp.float32)[:, :, None]

    inputs = (x_p, mask, emb_p, w0_p, b0_p, adj_p, convw_p, convb_p, ltw_p, ltb_p)

    flops = 2 * (G * N_pad * F_pad * H_pad
                 + L * (N_pad * H_pad * H_pad + N_pad * N_pad * H_pad)
                 + N_pad * H_pad * C_pad)
    bytes_accessed = sum(int(a.size) * a.dtype.itemsize for a in inputs) \
        + N_pad * C_pad * 4
    cost = pl.CostEstimate(flops=int(flops),
                           transcendentals=int(N_pad * C_pad + N_pad),
                           bytes_accessed=int(bytes_accessed))

    kernel = functools.partial(_net2_kernel, num_graphs=G)

    out_p = pl.pallas_call(
        kernel,
        out_shape=jax.ShapeDtypeStruct((N_pad, C_pad), jnp.float32),
        grid_spec=pltpu.PrefetchScalarGridSpec(
            num_scalar_prefetch=0,
            grid=(L,),
            in_specs=[
                pl.BlockSpec((N_pad, F_pad), lambda l: (0, 0)),        # x
                pl.BlockSpec((G, N_pad, 1), lambda l: (0, 0, 0)),      # graph mask
                pl.BlockSpec((G, H_pad), lambda l: (0, 0)),            # E_meta
                pl.BlockSpec((F_pad, 1), lambda l: (0, 0)),            # w0
                pl.BlockSpec((F_pad, H_pad), lambda l: (0, 0)),        # b0
                pl.BlockSpec((N_pad, N_pad), lambda l: (0, 0)),        # adj
                pl.BlockSpec((1, H_pad, H_pad), lambda l: (l, 0, 0)),  # conv W_l
                pl.BlockSpec((1, 1, H_pad), lambda l: (l, 0, 0)),      # conv b_l
                pl.BlockSpec((H_pad, C_pad), lambda l: (0, 0)),        # lt1 W
                pl.BlockSpec((1, C_pad), lambda l: (0, 0)),            # lt1 b
            ],
            out_specs=pl.BlockSpec((N_pad, C_pad), lambda l: (0, 0)),
            scratch_shapes=[pltpu.VMEM((N_pad, H_pad), jnp.float32)],  # resident h
        ),
        compiler_params=pltpu.CompilerParams(
            dimension_semantics=("arbitrary",),       # layer axis is sequential
            vmem_limit_bytes=32 * 1024 * 1024,
        ),
        cost_estimate=cost,
    )(*inputs)
    # TODO(synk): for large N, tile the adj@h aggregation over node-row blocks
    # (parallel axis for v7x's 2 TCs) or use block-sparse gather; full-array
    # blocks are optimal at these small shapes.

    return out_p[:N, :C]


# ----------------------------------------------------------------------------
# Glue (plain JAX): adjacency normalization, params, pure-JAX reference
# ----------------------------------------------------------------------------

def normalized_adjacency(edge_index, num_nodes):
    """Dense  D^{-1/2} (A + I) D^{-1/2}  as used by PyG GCNConv.
    Note: duplicate edges are deduplicated by .set (matches no-duplicate input)."""
    src, dst = edge_index
    adj = jnp.zeros((num_nodes, num_nodes), jnp.float32)
    adj = adj.at[src, dst].set(1.0)
    adj = adj + jnp.eye(num_nodes, dtype=jnp.float32)        # self loops
    deg = adj.sum(axis=1)
    dinv = jnp.where(deg > 0, 1.0 / jnp.sqrt(deg), 0.0)
    return adj * dinv[:, None] * dinv[None, :]


def net2_reference(params, x, adj, E_meta, ptr, *, compute_dtype=jnp.float32):
    """Pure-JAX reference (same matmul-operand dtype policy as the kernel)."""
    cd = compute_dtype
    pieces = []
    for i in range(E_meta.shape[0]):
        lo, hi = int(ptr[i]), int(ptr[i + 1])
        new_w0 = jnp.maximum(params["w0"] * E_meta[i][None, :] + params["b0"], 0.0)
        pieces.append(jnp.dot(x[lo:hi].astype(cd), new_w0.astype(cd),
                              preferred_element_type=jnp.float32))
    h = jnp.concatenate(pieces, axis=0)
    for (w, b) in params["conv"]:
        hw = jnp.dot(h.astype(cd), w.astype(cd), preferred_element_type=jnp.float32)
        agg = jnp.dot(adj.astype(cd), hw.astype(cd), preferred_element_type=jnp.float32)
        h = jnp.maximum(agg + b[None, :], 0.0)
    z = jnp.dot(h.astype(cd), params["lt1_w"].astype(cd),
                preferred_element_type=jnp.float32) + params["lt1_b"][None, :]
    return jax.nn.log_softmax(z, axis=1)


def init_params(key, num_features, hidden, num_classes, num_layers):
    ks = jax.random.split(key, 4 + 2 * num_layers)
    params = {
        "w0": 0.1 * jax.random.normal(ks[0], (num_features, 1), jnp.float32),
        "b0": 0.1 * jax.random.normal(ks[1], (num_features, hidden), jnp.float32),
        # stored already transposed to (in, out) for the kernels
        "lt1_w": 0.1 * jax.random.normal(ks[2], (hidden, num_classes), jnp.float32),
        "lt1_b": 0.1 * jax.random.normal(ks[3], (num_classes,), jnp.float32),
        "conv": [],
    }
    for i in range(num_layers):
        w = 0.1 * jax.random.normal(ks[4 + 2 * i], (hidden, hidden), jnp.float32)
        b = 0.1 * jax.random.normal(ks[5 + 2 * i], (hidden,), jnp.float32)
        params["conv"].append((w, b))
    return params


if __name__ == "__main__":
    # small shapes consistent with the module
    num_features, hidden, num_classes, num_layers = 16, 32, 8, 2
    num_graphs, nodes_per_graph = 2, 8
    num_nodes = num_graphs * nodes_per_graph

    key = jax.random.PRNGKey(0)
    k_x, k_e, k_p = jax.random.split(key, 3)

    x = jax.random.normal(k_x, (num_nodes, num_features), jnp.float32)
    E_meta = jax.random.normal(k_e, (num_graphs, hidden), jnp.float32)
    ptr = np.array([0, nodes_per_graph, num_nodes], dtype=np.int32)

    # simple ring edges inside each graph (global node ids, like PyG batching)
    srcs, dsts = [], []
    for g in range(num_graphs):
        base = g * nodes_per_graph
        for n in range(nodes_per_graph):
            srcs.append(base + n)
            dsts.append(base + (n + 1) % nodes_per_graph)
            srcs.append(base + (n + 1) % nodes_per_graph)
            dsts.append(base + n)
    edge_index = jnp.array([srcs, dsts], dtype=jnp.int32)

    params = init_params(k_p, num_features, hidden, num_classes, num_layers)

    # adjacency hoisted out of the per-forward path: built once, reused
    adj = normalized_adjacency(edge_index, num_nodes)
    ptr_j = jnp.asarray(ptr)

    # f32 matmul path, tight check against the pure-JAX reference
    out = net2_forward(params, x, adj, E_meta, ptr_j, compute_dtype=jnp.float32)
    out = jax.block_until_ready(out)
    ref = net2_reference(params, x, adj, E_meta, ptr, compute_dtype=jnp.float32)
    np.testing.assert_allclose(np.asarray(out), np.asarray(ref),
                               rtol=2e-4, atol=2e-4)
    assert out.shape == (num_nodes, num_classes)

    # bf16 matmul-operand path (v6e/v7x fast MXU), elementwise math stays f32
    out_bf = net2_forward(params, x, adj, E_meta, ptr_j, compute_dtype=jnp.bfloat16)
    out_bf = jax.block_until_ready(out_bf)
    ref_bf = net2_reference(params, x, adj, E_meta, ptr, compute_dtype=jnp.bfloat16)
    np.testing.assert_allclose(np.asarray(out_bf), np.asarray(ref_bf),
                               rtol=2e-2, atol=2e-2)

    print("KERNEL_OK")
</pallas_src>

<mosaic_0001>
module attributes {stable_mosaic.version = 11 : i64} {
  func.func @_net2_kernel(%arg0: i32, %arg1: memref<16x128xf32, #tpu.memory_space<vmem>>, %arg2: memref<2x16x1xf32, #tpu.memory_space<vmem>>, %arg3: memref<2x128xf32, #tpu.memory_space<vmem>>, %arg4: memref<128x1xf32, #tpu.memory_space<vmem>>, %arg5: memref<128x128xf32, #tpu.memory_space<vmem>>, %arg6: memref<16x16xf32, #tpu.memory_space<vmem>>, %arg7: memref<1x128x128xf32, #tpu.memory_space<vmem>>, %arg8: memref<1x1x128xf32, #tpu.memory_space<vmem>>, %arg9: memref<128x128xf32, #tpu.memory_space<vmem>>, %arg10: memref<1x128xf32, #tpu.memory_space<vmem>>, %arg11: memref<16x128xf32, #tpu.memory_space<vmem>>, %arg12: memref<16x128xf32, #tpu.memory_space<vmem>>) attributes {dimension_semantics = [#tpu.dimension_semantics<arbitrary>], iteration_bounds = array<i64: 2>, scalar_prefetch = 0 : i64, scratch_operands = 1 : i64, tpu.core_type = #tpu.core_type<tc>, window_params = [{pipeline_mode = #tpu.pipeline_mode<synchronous>, transform_indices = @transform_0, window_bounds = array<i64: 16, 128>}, {pipeline_mode = #tpu.pipeline_mode<synchronous>, transform_indices = @transform_1, window_bounds = array<i64: 2, 16, 1>}, {pipeline_mode = #tpu.pipeline_mode<synchronous>, transform_indices = @transform_2, window_bounds = array<i64: 2, 128>}, {pipeline_mode = #tpu.pipeline_mode<synchronous>, transform_indices = @transform_3, window_bounds = array<i64: 128, 1>}, {pipeline_mode = #tpu.pipeline_mode<synchronous>, transform_indices = @transform_4, window_bounds = array<i64: 128, 128>}, {pipeline_mode = #tpu.pipeline_mode<synchronous>, transform_indices = @transform_5, window_bounds = array<i64: 16, 16>}, {transform_indices = @transform_6, window_bounds = array<i64: 1, 128, 128>}, {transform_indices = @transform_7, window_bounds = array<i64: 1, 1, 128>}, {pipeline_mode = #tpu.pipeline_mode<synchronous>, transform_indices = @transform_8, window_bounds = array<i64: 128, 128>}, {pipeline_mode = #tpu.pipeline_mode<synchronous>, transform_indices = @transform_9, window_bounds = array<i64: 1, 128>}, {pipeline_mode = #tpu.pipeline_mode<synchronous>, transform_indices = @transform_10, window_bounds = array<i64: 16, 128>}]} {
    %c0_i32 = arith.constant 0 : i32
    %0 = arith.cmpi eq, %arg0, %c0_i32 : i32
    %1 = arith.extui %0 : i1 to i32
    %c0_i32_0 = arith.constant 0 : i32
    %2 = arith.cmpi ne, %1, %c0_i32_0 : i32
    scf.if %2 {
      %c0_15 = arith.constant 0 : index
      %c0_16 = arith.constant 0 : index
      %19 = vector.load %arg4[%c0_15, %c0_16] : memref<128x1xf32, #tpu.memory_space<vmem>>, vector<128x1xf32>
      %c0_17 = arith.constant 0 : index
      %c0_18 = arith.constant 0 : index
      %20 = vector.load %arg5[%c0_17, %c0_18] : memref<128x128xf32, #tpu.memory_space<vmem>>, vector<128x128xf32>
      %c0_19 = arith.constant 0 : index
      %c0_20 = arith.constant 0 : index
      %21 = vector.load %arg1[%c0_19, %c0_20] : memref<16x128xf32, #tpu.memory_space<vmem>>, vector<16x128xf32>
      %cst_21 = arith.constant 0.000000e+00 : f32
      %22 = vector.broadcast %cst_21 : f32 to vector<16x128xf32>
      %c0_22 = arith.constant 0 : index
      %c0_23 = arith.constant 0 : index
      %23 = vector.load %arg3[%c0_22, %c0_23] : memref<2x128xf32, #tpu.memory_space<vmem>>, vector<1x128xf32>
      %24 = vector.broadcast %19 : vector<128x1xf32> to vector<128x128xf32>
      %25 = vector.broadcast %23 : vector<1x128xf32> to vector<128x128xf32>
      %26 = arith.mulf %24, %25 : vector<128x128xf32>
      %27 = arith.addf %26, %20 : vector<128x128xf32>
      %cst_24 = arith.constant 0.000000e+00 : f32
      %28 = vector.broadcast %cst_24 : f32 to vector<128x128xf32>
      %29 = arith.maximumf %27, %28 : vector<128x128xf32>
      %cst_25 = arith.constant dense<0.000000e+00> : vector<16x128xf32>
      %30 = tpu.matmul %21, %29, %cst_25 {dimension_numbers = #tpu.dot_dimension_numbers<[1], [0], [0], [1], [0, 0, 1, 1], [], []>} : vector<16x128xf32>, vector<128x128xf32>, vector<16x128xf32> -> vector<16x128xf32>
      %c0_26 = arith.constant 0 : index
      %c0_27 = arith.constant 0 : index
      %c0_28 = arith.constant 0 : index
      %31 = vector.load %arg2[%c0_26, %c0_27, %c0_28] : memref<2x16x1xf32, #tpu.memory_space<vmem>>, vector<1x16x1xf32>
      %32 = vector.shape_cast %31 : vector<1x16x1xf32> to vector<16x1xf32>
      %33 = vector.broadcast %32 : vector<16x1xf32> to vector<16x128xf32>
      %34 = arith.mulf %33, %30 : vector<16x128xf32>
      %35 = arith.addf %22, %34 : vector<16x128xf32>
      %c1 = arith.constant 1 : index
      %c0_29 = arith.constant 0 : index
      %36 = vector.load %arg3[%c1, %c0_29] : memref<2x128xf32, #tpu.memory_space<vmem>>, vector<1x128xf32>
      %37 = vector.broadcast %19 : vector<128x1xf32> to vector<128x128xf32>
      %38 = vector.broadcast %36 : vector<1x128xf32> to vector<128x128xf32>
      %39 = arith.mulf %37, %38 : vector<128x128xf32>
      %40 = arith.addf %39, %20 : vector<128x128xf32>
      %cst_30 = arith.constant 0.000000e+00 : f32
      %41 = vector.broadcast %cst_30 : f32 to vector<128x128xf32>
      %42 = arith.maximumf %40, %41 : vector<128x128xf32>
      %cst_31 = arith.constant dense<0.000000e+00> : vector<16x128xf32>
      %43 = tpu.matmul %21, %42, %cst_31 {dimension_numbers = #tpu.dot_dimension_numbers<[1], [0], [0], [1], [0, 0, 1, 1], [], []>} : vector<16x128xf32>, vector<128x128xf32>, vector<16x128xf32> -> vector<16x128xf32>
      %c1_32 = arith.constant 1 : index
      %c0_33 = arith.constant 0 : index
      %c0_34 = arith.constant 0 : index
      %44 = vector.load %arg2[%c1_32, %c0_33, %c0_34] : memref<2x16x1xf32, #tpu.memory_space<vmem>>, vector<1x16x1xf32>
      %45 = vector.shape_cast %44 : vector<1x16x1xf32> to vector<16x1xf32>
      %46 = vector.broadcast %45 : vector<16x1xf32> to vector<16x128xf32>
      %47 = arith.mulf %46, %43 : vector<16x128xf32>
      %48 = arith.addf %35, %47 : vector<16x128xf32>
      %c0_35 = arith.constant 0 : index
      %c0_36 = arith.constant 0 : index
      %49 = vector.load %arg12[%c0_35, %c0_36] : memref<16x128xf32, #tpu.memory_space<vmem>>, vector<16x128xf32>
      tpu.vector_store %arg12[%c0_35, %c0_36], %48 {strides = array<i32>} : memref<16x128xf32, #tpu.memory_space<vmem>>, vector<16x128xf32>,
    } else {
    }
    %c0 = arith.constant 0 : index
    %c0_1 = arith.constant 0 : index
    %c0_2 = arith.constant 0 : index
    %3 = vector.load %arg7[%c0, %c0_1, %c0_2] : memref<1x128x128xf32, #tpu.memory_space<vmem>>, vector<1x128x128xf32>
    %4 = vector.shape_cast %3 : vector<1x128x128xf32> to vector<128x128xf32>
    %c0_3 = arith.constant 0 : index
    %c0_4 = arith.constant 0 : index
    %c0_5 = arith.constant 0 : index
    %5 = vector.load %arg8[%c0_3, %c0_4, %c0_5] : memref<1x1x128xf32, #tpu.memory_space<vmem>>, vector<1x1x128xf32>
    %6 = vector.shape_cast %5 : vector<1x1x128xf32> to vector<1x128xf32>
    %c0_6 = arith.constant 0 : index
    %c0_7 = arith.constant 0 : index
    %7 = vector.load %arg12[%c0_6, %c0_7] : memref<16x128xf32, #tpu.memory_space<vmem>>, vector<16x128xf32>
    %cst = arith.constant dense<0.000000e+00> : vector<16x128xf32>
    %8 = tpu.matmul %7, %4, %cst {dimension_numbers = #tpu.dot_dimension_numbers<[1], [0], [0], [1], [0, 0, 1, 1], [], []>} : vector<16x128xf32>, vector<128x128xf32>, vector<16x128xf32> -> vector<16x128xf32>
    %c0_8 = arith.constant 0 : index
    %c0_9 = arith.constant 0 : index
    %9 = vector.load %arg6[%c0_8, %c0_9] : memref<16x16xf32, #tpu.memory_space<vmem>>, vector<16x16xf32>
    %cst_10 = arith.constant dense<0.000000e+00> : vector<16x128xf32>
    %10 = tpu.matmul %9, %8, %cst_10 {dimension_numbers = #tpu.dot_dimension_numbers<[1], [0], [0], [1], [0, 0, 1, 1], [], []>} : vector<16x16xf32>, vector<16x128xf32>, vector<16x128xf32> -> vector<16x128xf32>
    %11 = vector.broadcast %6 : vector<1x128xf32> to vector<16x128xf32>
    %12 = arith.addf %10, %11 : vector<16x128xf32>
    %cst_11 = arith.constant 0.000000e+00 : f32
    %13 = vector.broadcast %cst_11 : f32 to vector<16x128xf32>
    %14 = arith.maximumf %12, %13 : vector<16x128xf32>
    %c0_12 = arith.constant 0 : index
    %c0_13 = arith.constant 0 : index
    %15 = vector.load %arg12[%c0_12, %c0_13] : memref<16x128xf32, #tpu.memory_space<vmem>>, vector<16x128xf32>
    tpu.vector_store %arg12[%c0_12, %c0_13], %14 {strides = array<i32>} : memref<16x128xf32, #tpu.memory_space<vmem>>, vector<16x128xf32>,
    %c1_i32 = arith.constant 1 : i32
    %16 = arith.cmpi eq, %arg0, %c1_i32 : i32
    %17 = arith.extui %16 : i1 to i32
    %c0_i32_14 = arith.constant 0 : i32
    %18 = arith.cmpi ne, %17, %c0_i32_14 : i32
    scf.if %18 {
      %c0_15 = arith.constant 0 : index
      %c0_16 = arith.constant 0 : index
      %19 = vector.load %arg12[%c0_15, %c0_16] : memref<16x128xf32, #tpu.memory_space<vmem>>, vector<16x128xf32>
      %c0_17 = arith.constant 0 : index
      %c0_18 = arith.constant 0 : index
      %20 = vector.load %arg9[%c0_17, %c0_18] : memref<128x128xf32, #tpu.memory_space<vmem>>, vector<128x128xf32>
      %cst_19 = arith.constant dense<0.000000e+00> : vector<16x128xf32>
      %21 = tpu.matmul %19, %20, %cst_19 {dimension_numbers = #tpu.dot_dimension_numbers<[1], [0], [0], [1], [0, 0, 1, 1], [], []>} : vector<16x128xf32>, vector<128x128xf32>, vector<16x128xf32> -> vector<16x128xf32>
      %c0_20 = arith.constant 0 : index
      %c0_21 = arith.constant 0 : index
      %22 = vector.load %arg10[%c0_20, %c0_21] : memref<1x128xf32, #tpu.memory_space<vmem>>, vector<1x128xf32>
      %23 = vector.broadcast %22 : vector<1x128xf32> to vector<16x128xf32>
      %24 = arith.addf %21, %23 : vector<16x128xf32>
      %cst_22 = arith.constant dense<0xFF800000> : vector<16xf32>
      %25 = vector.multi_reduction <maximumf>, %24, %cst_22 [1] : vector<16x128xf32> to vector<16xf32>
      %26 = vector.shape_cast %25 : vector<16xf32> to vector<16x1xf32>
      %27 = vector.broadcast %26 : vector<16x1xf32> to vector<16x128xf32>
      %28 = arith.subf %24, %27 : vector<16x128xf32>
      %29 = math.exp %28 : vector<16x128xf32>
      %cst_23 = arith.constant dense<0.000000e+00> : vector<16xf32>
      %30 = vector.multi_reduction <add>, %29, %cst_23 [1] : vector<16x128xf32> to vector<16xf32>
      %31 = vector.shape_cast %30 : vector<16xf32> to vector<16x1xf32>
      %32 = math.log %31 : vector<16x1xf32>
      %33 = arith.addf %32, %26 : vector<16x1xf32>
      %34 = vector.broadcast %33 : vector<16x1xf32> to vector<16x128xf32>
      %35 = arith.subf %24, %34 : vector<16x128xf32>
      %c0_24 = arith.constant 0 : index
      %c0_25 = arith.constant 0 : index
      %36 = vector.load %arg11[%c0_24, %c0_25] : memref<16x128xf32, #tpu.memory_space<vmem>>, vector<16x128xf32>
      tpu.vector_store %arg11[%c0_24, %c0_25], %35 {strides = array<i32>} : memref<16x128xf32, #tpu.memory_space<vmem>>, vector<16x128xf32>,
    } else {
    }
    return
  }
  func.func @transform_0(%arg0: i32) -> (i32, i32) {
    %c0_i32 = arith.constant 0 : i32
    %c0_i32_0 = arith.constant 0 : i32
    %c0_i32_1 = arith.constant 0 : i32
    return %c0_i32, %c0_i32_0 : i32, i32
  }
  func.func @transform_1(%arg0: i32) -> (i32, i32, i32) {
    %c0_i32 = arith.constant 0 : i32
    %c0_i32_0 = arith.constant 0 : i32
    %c0_i32_1 = arith.constant 0 : i32
    %c0_i32_2 = arith.constant 0 : i32
    return %c0_i32, %c0_i32_0, %c0_i32_1 : i32, i32, i32
  }
  func.func @transform_2(%arg0: i32) -> (i32, i32) {
    %c0_i32 = arith.constant 0 : i32
    %c0_i32_0 = arith.constant 0 : i32
    %c0_i32_1 = arith.constant 0 : i32
    return %c0_i32, %c0_i32_0 : i32, i32
  }
  func.func @transform_3(%arg0: i32) -> (i32, i32) {
    %c0_i32 = arith.constant 0 : i32
    %c0_i32_0 = arith.constant 0 : i32
    %c0_i32_1 = arith.constant 0 : i32
    return %c0_i32, %c0_i32_0 : i32, i32
  }
  func.func @transform_4(%arg0: i32) -> (i32, i32) {
    %c0_i32 = arith.constant 0 : i32
    %c0_i32_0 = arith.constant 0 : i32
    %c0_i32_1 = arith.constant 0 : i32
    return %c0_i32, %c0_i32_0 : i32, i32
  }
  func.func @transform_5(%arg0: i32) -> (i32, i32) {
    %c0_i32 = arith.constant 0 : i32
    %c0_i32_0 = arith.constant 0 : i32
    %c0_i32_1 = arith.constant 0 : i32
    return %c0_i32, %c0_i32_0 : i32, i32
  }
  func.func @transform_6(%arg0: i32) -> (i32, i32, i32) {
    %c0_i32 = arith.constant 0 : i32
    %c0_i32_0 = arith.constant 0 : i32
    %c0_i32_1 = arith.constant 0 : i32
    return %arg0, %c0_i32, %c0_i32_0 : i32, i32, i32
  }
  func.func @transform_7(%arg0: i32) -> (i32, i32, i32) {
    %c0_i32 = arith.constant 0 : i32
    %c0_i32_0 = arith.constant 0 : i32
    %c0_i32_1 = arith.constant 0 : i32
    return %arg0, %c0_i32, %c0_i32_0 : i32, i32, i32
  }
  func.func @transform_8(%arg0: i32) -> (i32, i32) {
    %c0_i32 = arith.constant 0 : i32
    %c0_i32_0 = arith.constant 0 : i32
    %c0_i32_1 = arith.constant 0 : i32
    return %c0_i32, %c0_i32_0 : i32, i32
  }
  func.func @transform_9(%arg0: i32) -> (i32, i32) {
    %c0_i32 = arith.constant 0 : i32
    %c0_i32_0 = arith.constant 0 : i32
    %c0_i32_1 = arith.constant 0 : i32
    return %c0_i32, %c0_i32_0 : i32, i32
  }
  func.func @transform_10(%arg0: i32) -> (i32, i32) {
    %c0_i32 = arith.constant 0 : i32
    %c0_i32_0 = arith.constant 0 : i32
    %c0_i32_1 = arith.constant 0 : i32
    return %c0_i32, %c0_i32_0 : i32, i32
  }
}

</mosaic_0001>

<llo_original>
// kernel: net2_forward.1
$region0: #{net2_forward.1}
  #allocation0 [shape = 'u32[]', space=smem, size = 0x4, offset = 0x4, fixed_abs, tag = 'smem constant byte address 0x4 - core index']
  #allocation1 [shape = 'u32[72,128]{1,0:T(1,128)}', space=vmem, size = 0x9000, scoped, tag = 'internal scratch']
  #allocation2 [shape = 'f32[16,128]{1,0:T(8,128)}', space=vmem, size = 0x2000, scoped, tag = 'scratch operand']
  %s0 = inlined_call_operand.vmem [shape: f32[16,128], index: 0, kind: input, shape index: {}]
  %s1 = inlined_call_operand.vmem [shape: f32[2,16,1], index: 1, kind: input, shape index: {}]
  %s2 = inlined_call_operand.vmem [shape: f32[2,128], index: 2, kind: input, shape index: {}]
  %s3 = inlined_call_operand.vmem [shape: f32[128,1], index: 3, kind: input, shape index: {}]
  %s4 = inlined_call_operand.vmem [shape: f32[128,128], index: 4, kind: input, shape index: {}]
  %s5 = inlined_call_operand.vmem [shape: f32[16,16], index: 5, kind: input, shape index: {}]
  %s6 = inlined_call_operand.vmem [shape: f32[2,128,128], index: 6, kind: input, shape index: {}]
  %s7 = inlined_call_operand.vmem [shape: f32[2,1,128], index: 7, kind: input, shape index: {}]
  %s8 = inlined_call_operand.vmem [shape: f32[128,128], index: 8, kind: input, shape index: {}]
  %s9 = inlined_call_operand.vmem [shape: f32[1,128], index: 9, kind: input, shape index: {}]
  %s10 = inlined_call_operand.vmem [shape: f32[16,128], index: 10, kind: output, shape index: {}]
  %s11 = sld [smem:[#allocation0]]
  $region81: #{net2_forward.1} parent=0
    _
  %s13 = ssub.s32 1, %s11
  %s14 = scalar_select 0, %s13, %s11
  loop: start=0, step=1, limit=4
  $region2: #{net2_forward.1} parent=0 // loop_pre_header
    _
  $region3: #{net2_forward.1} parent=0 // loop_header
    %s16 = sphi 0, %s20
    %p17 = scmp.ge.s32.totalorder %s16, 4
    %s24 = sphi 0, %s24
    %s26 = sphi 0, %s24
    %s27 = sphi 0, %s26
    %s41 = sphi 0, %s27
    %s45 = sphi 0, %s45
    %s47 = sphi 0, %s45
    %s48 = sphi 0, %s47
    %s62 = sphi 0, %s48
    %s66 = sphi 0, %s66
    %s68 = sphi 0, %s66
    %s69 = sphi 0, %s68
    %s83 = sphi 0, %s69
    %s87 = sphi 0, %s87
    %s89 = sphi 0, %s87
    %s90 = sphi 0, %s89
    %s104 = sphi 0, %s90
    %s108 = sphi 0, %s108
    %s110 = sphi 0, %s108
    %s111 = sphi 0, %s110
    %s125 = sphi 0, %s111
    %s129 = sphi 0, %s129
    %s131 = sphi 0, %s129
    %s132 = sphi 0, %s131
    %s146 = sphi 0, %s132
    %s152 = sphi 0, %s154
    %s155 = sphi 0, %s152
    %s156 = sphi 0, %s155
    %s172 = sphi 0, %s156
    %s178 = sphi 0, %s180
    %s181 = sphi 0, %s178
    %s182 = sphi 0, %s181
    %s198 = sphi 0, %s182
    %s202 = sphi 0, %s202
    %s204 = sphi 0, %s202
    %s205 = sphi 0, %s204
    %s219 = sphi 0, %s205
    %s223 = sphi 0, %s223
    %s225 = sphi 0, %s223
    %s226 = sphi 0, %s225
    %s240 = sphi 0, %s226
    %s244 = sphi 0, %s244
    %s246 = sphi 0, %s244
    %s247 = sphi 0, %s246
    %s261 = sphi 0, %s247
  $region4: #{net2_forward.1} parent=0 // loop_header_branch
    %19 = sbr.rel (%p17) target = $region8
  $region5: #{net2_forward.1} parent=0 // loop_body
    %s21 = ssub.s32 %s16, 1
    %s22 = ssub.s32 %s16, 2
    %s23 = sadd.s32 %s16, 1
    %s25 = sadd.s32 %s24, 1
    %p28 = scmp.eq.s32.totalorder %s16, 1
    %p29 = scmp.ne.s32.totalorder %s24, %s26
    %p30 = scmp.eq.s32.totalorder %s16, 0
    %p31 = por %p29, %p30
    %p32 = scmp.ne.s32.totalorder %s24, %s26
    %p33 = scmp.eq.s32.totalorder %s21, 1
    %p34 = por %p32, %p33
    %p35 = scmp.ne.s32.totalorder %s26, %s27
    %p36 = scmp.eq.s32.totalorder %s21, 0
    %p37 = por %p35, %p36
    %p38 = scmp.ne.s32.totalorder %s26, %s27
    %p39 = scmp.eq.s32.totalorder %s22, 1
    %p40 = por %p38, %p39
    %p42 = scmp.ne.s32.totalorder %s27, %s41
    %p43 = scmp.eq.s32.totalorder %s22, 0
    %p44 = por %p42, %p43
    %s46 = sadd.s32 %s45, 1
    %p49 = scmp.eq.s32.totalorder %s16, 1
    %p50 = scmp.ne.s32.totalorder %s45, %s47
    %p51 = scmp.eq.s32.totalorder %s16, 0
    %p52 = por %p50, %p51
    %p53 = scmp.ne.s32.totalorder %s45, %s47
    %p54 = scmp.eq.s32.totalorder %s21, 1
    %p55 = por %p53, %p54
    %p56 = scmp.ne.s32.totalorder %s47, %s48
    %p57 = scmp.eq.s32.totalorder %s21, 0
    %p58 = por %p56, %p57
    %p59 = scmp.ne.s32.totalorder %s47, %s48
    %p60 = scmp.eq.s32.totalorder %s22, 1
    %p61 = por %p59, %p60
    %p63 = scmp.ne.s32.totalorder %s48, %s62
    %p64 = scmp.eq.s32.totalorder %s22, 0
    %p65 = por %p63, %p64
    %s67 = sadd.s32 %s66, 1
    %p70 = scmp.eq.s32.totalorder %s16, 1
    %p71 = scmp.ne.s32.totalorder %s66, %s68
    %p72 = scmp.eq.s32.totalorder %s16, 0
    %p73 = por %p71, %p72
    %p74 = scmp.ne.s32.totalorder %s66, %s68
    %p75 = scmp.eq.s32.totalorder %s21, 1
    %p76 = por %p74, %p75
    %p77 = scmp.ne.s32.totalorder %s68, %s69
    %p78 = scmp.eq.s32.totalorder %s21, 0
    %p79 = por %p77, %p78
    %p80 = scmp.ne.s32.totalorder %s68, %s69
    %p81 = scmp.eq.s32.totalorder %s22, 1
    %p82 = por %p80, %p81
    %p84 = scmp.ne.s32.totalorder %s69, %s83
    %p85 = scmp.eq.s32.totalorder %s22, 0
    %p86 = por %p84, %p85
    %s88 = sadd.s32 %s87, 1
    %p91 = scmp.eq.s32.totalorder %s16, 1
    %p92 = scmp.ne.s32.totalorder %s87, %s89
    %p93 = scmp.eq.s32.totalorder %s16, 0
    %p94 = por %p92, %p93
    %p95 = scmp.ne.s32.totalorder %s87, %s89
    %p96 = scmp.eq.s32.totalorder %s21, 1
    %p97 = por %p95, %p96
    %p98 = scmp.ne.s32.totalorder %s89, %s90
    %p99 = scmp.eq.s32.totalorder %s21, 0
    %p100 = por %p98, %p99
    %p101 = scmp.ne.s32.totalorder %s89, %s90
    %p102 = scmp.eq.s32.totalorder %s22, 1
    %p103 = por %p101, %p102
    %p105 = scmp.ne.s32.totalorder %s90, %s104
    %p106 = scmp.eq.s32.totalorder %s22, 0
    %p107 = por %p105, %p106
    %s109 = sadd.s32 %s108, 1
    %p112 = scmp.eq.s32.totalorder %s16, 1
    %p113 = scmp.ne.s32.totalorder %s108, %s110
    %p114 = scmp.eq.s32.totalorder %s16, 0
    %p115 = por %p113, %p114
    %p116 = scmp.ne.s32.totalorder %s108, %s110
    %p117 = scmp.eq.s32.totalorder %s21, 1
    %p118 = por %p116, %p117
    %p119 = scmp.ne.s32.totalorder %s110, %s111
    %p120 = scmp.eq.s32.totalorder %s21, 0
    %p121 = por %p119, %p120
    %p122 = scmp.ne.s32.totalorder %s110, %s111
    %p123 = scmp.eq.s32.totalorder %s22, 1
    %p124 = por %p122, %p123
    %p126 = scmp.ne.s32.totalorder %s111, %s125
    %p127 = scmp.eq.s32.totalorder %s22, 0
    %p128 = por %p126, %p127
    %s130 = sadd.s32 %s129, 1
    %p133 = scmp.eq.s32.totalorder %s16, 1
    %p134 = scmp.ne.s32.totalorder %s129, %s131
    %p135 = scmp.eq.s32.totalorder %s16, 0
    %p136 = por %p134, %p135
    %p137 = scmp.ne.s32.totalorder %s129, %s131
    %p138 = scmp.eq.s32.totalorder %s21, 1
    %p139 = por %p137, %p138
    %p140 = scmp.ne.s32.totalorder %s131, %s132
    %p141 = scmp.eq.s32.totalorder %s21, 0
    %p142 = por %p140, %p141
    %p143 = scmp.ne.s32.totalorder %s131, %s132
    %p144 = scmp.eq.s32.totalorder %s22, 1
    %p145 = por %p143, %p144
    %p147 = scmp.ne.s32.totalorder %s132, %s146
    %p148 = scmp.eq.s32.totalorder %s22, 0
    %p149 = por %p147, %p148
    %s150 = ssub.s32 %s16, %s23
    %p151 = scmp.eq.s32.totalorder %s150, 0
    %s153 = sadd.s32 %s152, 1
    %s154 = scalar_select %p151, %s152, %s153
    %p157 = pneg %p151
    %p158 = scmp.eq.s32.totalorder %s16, 1
    %p159 = por %p157, %p158
    %p160 = scmp.ne.s32.totalorder %s152, %s155
    %p161 = scmp.eq.s32.totalorder %s16, 0
    %p162 = por %p160, %p161
    %p163 = scmp.ne.s32.totalorder %s152, %s155
    %p164 = scmp.eq.s32.totalorder %s21, 1
    %p165 = por %p163, %p164
    %p166 = scmp.ne.s32.totalorder %s155, %s156
    %p167 = scmp.eq.s32.totalorder %s21, 0
    %p168 = por %p166, %p167
    %p169 = scmp.ne.s32.totalorder %s155, %s156
    %p170 = scmp.eq.s32.totalorder %s22, 1
    %p171 = por %p169, %p170
    %p173 = scmp.ne.s32.totalorder %s156, %s172
    %p174 = scmp.eq.s32.totalorder %s22, 0
    %p175 = por %p173, %p174
    %s176 = ssub.s32 %s16, %s23
    %p177 = scmp.eq.s32.totalorder %s176, 0
    %s179 = sadd.s32 %s178, 1
    %s180 = scalar_select %p177, %s178, %s179
    %p183 = pneg %p177
    %p184 = scmp.eq.s32.totalorder %s16, 1
    %p185 = por %p183, %p184
    %p186 = scmp.ne.s32.totalorder %s178, %s181
    %p187 = scmp.eq.s32.totalorder %s16, 0
    %p188 = por %p186, %p187
    %p189 = scmp.ne.s32.totalorder %s178, %s181
    %p190 = scmp.eq.s32.totalorder %s21, 1
    %p191 = por %p189, %p190
    %p192 = scmp.ne.s32.totalorder %s181, %s182
    %p193 = scmp.eq.s32.totalorder %s21, 0
    %p194 = por %p192, %p193
    %p195 = scmp.ne.s32.totalorder %s181, %s182
    %p196 = scmp.eq.s32.totalorder %s22, 1
    %p197 = por %p195, %p196
    %p199 = scmp.ne.s32.totalorder %s182, %s198
    %p200 = scmp.eq.s32.totalorder %s22, 0
    %p201 = por %p199, %p200
    %s203 = sadd.s32 %s202, 1
    %p206 = scmp.eq.s32.totalorder %s16, 1
    %p207 = scmp.ne.s32.totalorder %s202, %s204
    %p208 = scmp.eq.s32.totalorder %s16, 0
    %p209 = por %p207, %p208
    %p210 = scmp.ne.s32.totalorder %s202, %s204
    %p211 = scmp.eq.s32.totalorder %s21, 1
    %p212 = por %p210, %p211
    %p213 = scmp.ne.s32.totalorder %s204, %s205
    %p214 = scmp.eq.s32.totalorder %s21, 0
    %p215 = por %p213, %p214
    %p216 = scmp.ne.s32.totalorder %s204, %s205
    %p217 = scmp.eq.s32.totalorder %s22, 1
    %p218 = por %p216, %p217
    %p220 = scmp.ne.s32.totalorder %s205, %s219
    %p221 = scmp.eq.s32.totalorder %s22, 0
    %p222 = por %p220, %p221
    %s224 = sadd.s32 %s223, 1
    %p227 = scmp.eq.s32.totalorder %s16, 1
    %p228 = scmp.ne.s32.totalorder %s223, %s225
    %p229 = scmp.eq.s32.totalorder %s16, 0
    %p230 = por %p228, %p229
    %p231 = scmp.ne.s32.totalorder %s223, %s225
    %p232 = scmp.eq.s32.totalorder %s21, 1
    %p233 = por %p231, %p232
    %p234 = scmp.ne.s32.totalorder %s225, %s226
    %p235 = scmp.eq.s32.totalorder %s21, 0
    %p236 = por %p234, %p235
    %p237 = scmp.ne.s32.totalorder %s225, %s226
    %p238 = scmp.eq.s32.totalorder %s22, 1
    %p239 = por %p237, %p238
    %p241 = scmp.ne.s32.totalorder %s226, %s240
    %p242 = scmp.eq.s32.totalorder %s22, 0
    %p243 = por %p241, %p242
    %s245 = sadd.s32 %s244, 1
    %p248 = scmp.eq.s32.totalorder %s16, 1
    %p249 = scmp.ne.s32.totalorder %s244, %s246
    %p250 = scmp.eq.s32.totalorder %s16, 0
    %p251 = por %p249, %p250
    %p252 = scmp.ne.s32.totalorder %s244, %s246
    %p253 = scmp.eq.s32.totalorder %s21, 1
    %p254 = por %p252, %p253
    %p255 = scmp.ne.s32.totalorder %s246, %s247
    %p256 = scmp.eq.s32.totalorder %s21, 0
    %p257 = por %p255, %p256
    %p258 = scmp.ne.s32.totalorder %s246, %s247
    %p259 = scmp.eq.s32.totalorder %s22, 1
    %p260 = por %p258, %p259
    %p262 = scmp.ne.s32.totalorder %s247, %s261
    %p263 = scmp.eq.s32.totalorder %s22, 0
    %p264 = por %p262, %p263
    %p265 = scmp.le.s32.totalorder 1, %s16
    %p266 = scmp.lt.s32.totalorder %s16, 3
    %p267 = pnand %p265, %p266
    %p268 = pneg %p267
    // Predicated region
    $region9: #{net2_forward.1} parent=5 // pred_check
      _
    $region10: #{net2_forward.1} parent=5 // pred_check_branch
      %270 = sbr.rel (%p267) target = $region12
    $region11: #{net2_forward.1} parent=5 // pred_region
      %s271 = ssub.s32 %s16, 1
      // Predicated region
      $region13: #{net2_forward.1} parent=11 // pred_check
        %p272 = pneg %p37
      $region14: #{net2_forward.1} parent=11 // pred_check_branch
        %274 = sbr.rel (%p272) target = $region16
      $region15: #{net2_forward.1} parent=11 // pred_region
        _
      $region16: #{net2_forward.1} parent=11 // pred_fallthru
        _
      // Predicated region
      $region17: #{net2_forward.1} parent=11 // pred_check
        %p275 = pneg %p58
      $region18: #{net2_forward.1} parent=11 // pred_check_branch
        %277 = sbr.rel (%p275) target = $region20
      $region19: #{net2_forward.1} parent=11 // pred_region
        _
      $region20: #{net2_forward.1} parent=11 // pred_fallthru
        _
      // Predicated region
      $region21: #{net2_forward.1} parent=11 // pred_check
        %p278 = pneg %p79
      $region22: #{net2_forward.1} parent=11 // pred_check_branch
        %280 = sbr.rel (%p278) target = $region24
      $region23: #{net2_forward.1} parent=11 // pred_region
        _
      $region24: #{net2_forward.1} parent=11 // pred_fallthru
        _
      // Predicated region
      $region25: #{net2_forward.1} parent=11 // pred_check
        %p281 = pneg %p100
      $region26: #{net2_forward.1} parent=11 // pred_check_branch
        %283 = sbr.rel (%p281) target = $region28
      $region27: #{net2_forward.1} parent=11 // pred_region
        _
      $region28: #{net2_forward.1} parent=11 // pred_fallthru
        _
      // Predicated region
      $region29: #{net2_forward.1} parent=11 // pred_check
        %p284 = pneg %p121
      $region30: #{net2_forward.1} parent=11 // pred_check_branch
        %286 = sbr.rel (%p284) target = $region32
      $region31: #{net2_forward.1} parent=11 // pred_region
        _
      $region32: #{net2_forward.1} parent=11 // pred_fallthru
        _
      // Predicated region
      $region33: #{net2_forward.1} parent=11 // pred_check
        %p287 = pneg %p142
      $region34: #{net2_forward.1} parent=11 // pred_check_branch
        %289 = sbr.rel (%p287) target = $region36
      $region35: #{net2_forward.1} parent=11 // pred_region
        _
      $region36: #{net2_forward.1} parent=11 // pred_fallthru
        _
      // Predicated region
      $region37: #{net2_forward.1} parent=11 // pred_check
        %p290 = pneg %p215
      $region38: #{net2_forward.1} parent=11 // pred_check_branch
        %292 = sbr.rel (%p290) target = $region40
      $region39: #{net2_forward.1} parent=11 // pred_region
        _
      $region40: #{net2_forward.1} parent=11 // pred_fallthru
        _
      // Predicated region
      $region41: #{net2_forward.1} parent=11 // pred_check
        %p293 = pneg %p236
      $region42: #{net2_forward.1} parent=11 // pred_check_branch
        %295 = sbr.rel (%p293) target = $region44
      $region43: #{net2_forward.1} parent=11 // pred_region
        _
      $region44: #{net2_forward.1} parent=11 // pred_fallthru
        _
    $region12: #{net2_forward.1} parent=5 // pred_fallthru
      _
    %p296 = scmp.lt.s32.totalorder %s16, 2
    // Predicated region
    $region45: #{net2_forward.1} parent=5 // pred_check
      %p297 = pneg %p296
    $region46: #{net2_forward.1} parent=5 // pred_check_branch
      %299 = sbr.rel (%p297) target = $region48
    $region47: #{net2_forward.1} parent=5 // pred_region
      // Predicated region
      $region49: #{net2_forward.1} parent=47 // pred_check
        %p300 = pneg %p162
      $region50: #{net2_forward.1} parent=47 // pred_check_branch
        %302 = sbr.rel (%p300) target = $region52
      $region51: #{net2_forward.1} parent=47 // pred_region
        %p303 = scmp.lt.s32.totalorder %s16, 1
        %s304 = scalar_select %p303, %s16, 1
        %s305 = smul.addr %s304, 16
        %s306 = smul.addr %s305, 8
        %s307 = scalar_lea.vmem %s6, %s306
      $region52: #{net2_forward.1} parent=47 // pred_fallthru
        _
      // Predicated region
      $region53: #{net2_forward.1} parent=47 // pred_check
        %p308 = pneg %p188
      $region54: #{net2_forward.1} parent=47 // pred_check_branch
        %310 = sbr.rel (%p308) target = $region56
      $region55: #{net2_forward.1} parent=47 // pred_region
        %p311 = scmp.lt.s32.totalorder %s16, 1
        %s312 = scalar_select %p311, %s16, 1
        %s313 = scalar_lea.vmem %s7, %s312
      $region56: #{net2_forward.1} parent=47 // pred_fallthru
        _
    $region48: #{net2_forward.1} parent=5 // pred_fallthru
      _
    %p314 = scmp.le.s32.totalorder 1, %s16
    %p315 = scmp.lt.s32.totalorder %s16, 3
    %p316 = pnand %p314, %p315
    %p317 = pneg %p316
    // Predicated region
    $region57: #{net2_forward.1} parent=5 // pred_check
      _
    $region58: #{net2_forward.1} parent=5 // pred_check_branch
      %319 = sbr.rel (%p316) target = $region60
    $region59: #{net2_forward.1} parent=5 // pred_region
      %s320 = ssub.s32 %s16, 1
      %p321 = pneg %p37
      %p322 = pneg %p34
      %p323 = pneg %p58
      %p324 = pneg %p55
      %p325 = pneg %p79
      %p326 = pneg %p76
      %p327 = pneg %p100
      %p328 = pneg %p97
      %p329 = pneg %p121
      %p330 = pneg %p118
      %p331 = pneg %p142
      %p332 = pneg %p139
      %p333 = scmp.lt.s32.totalorder %s21, 1
      %s334 = scalar_select %p333, %s21, 1
      %s335 = smul.addr %s334, 16
      %s336 = smul.addr %s335, 8
      %s337 = scalar_lea.vmem %s6, %s336
      %p338 = pneg %p168
      %p339 = pneg %p165
      %p340 = scmp.lt.s32.totalorder %s21, 1
      %s341 = scalar_select %p340, %s21, 1
      %s342 = scalar_lea.vmem %s7, %s341
      %p343 = pneg %p194
      %p344 = pneg %p191
      %p345 = pneg %p215
      %p346 = pneg %p212
      %p347 = pneg %p236
      %p348 = pneg %p233
      %p349 = pneg %p257
      %p350 = pneg %p254
      %p351 = scmp.lt.s32.totalorder %s21, 1
      %s352 = scalar_select %p351, %s21, 1
      %s353 = smul.addr %s352, 16
      %s354 = smul.addr %s353, 8
      %s355 = scalar_lea.vmem %s6, %s354
      %p356 = scmp.lt.s32.totalorder %s21, 1
      %s357 = scalar_select %p356, %s21, 1
      %s358 = scalar_lea.vmem %s7, %s357
      %p359 = scmp.eq.s32.totalorder %s21, 0
      // Predicated region
      $region61: #{net2_forward.1} parent=59 // pred_check
        %p360 = pneg %p359
      $region62: #{net2_forward.1} parent=59 // pred_check_branch
        %362 = sbr.rel (%p360) target = $region64
      $region63: #{net2_forward.1} parent=59 // pred_region
        %v363 = vld [vmem:[%s3] sm:$0xff]
        %v364 = vld [vmem:[%s3 + $0x8] sm:$0xff]
        %v365 = vld [vmem:[%s3 + $0x10] sm:$0xff]
        %v366 = vld [vmem:[%s3 + $0x18] sm:$0xff]
        %v367 = vld [vmem:[%s3 + $0x20] sm:$0xff]
        %v368 = vld [vmem:[%s3 + $0x28] sm:$0xff]
        %v369 = vld [vmem:[%s3 + $0x30] sm:$0xff]
        %v370 = vld [vmem:[%s3 + $0x38] sm:$0xff]
        %v371 = vld [vmem:[%s3 + $0x40] sm:$0xff]
        %v372 = vld [vmem:[%s3 + $0x48] sm:$0xff]
        %v373 = vld [vmem:[%s3 + $0x50] sm:$0xff]
        %v374 = vld [vmem:[%s3 + $0x58] sm:$0xff]
        %v375 = vld [vmem:[%s3 + $0x60] sm:$0xff]
        %v376 = vld [vmem:[%s3 + $0x68] sm:$0xff]
        %v377 = vld [vmem:[%s3 + $0x70] sm:$0xff]
        %v378 = vld [vmem:[%s3 + $0x78] sm:$0xff]
        %v379 = vld [vmem:[%s4] sm:$0xff]
        %v380 = vld [vmem:[%s4 + $0x8] sm:$0xff]
        %v381 = vld [vmem:[%s4 + $0x10] sm:$0xff]
        %v382 = vld [vmem:[%s4 + $0x18] sm:$0xff]
        %v383 = vld [vmem:[%s4 + $0x20] sm:$0xff]
        %v384 = vld [vmem:[%s4 + $0x28] sm:$0xff]
        %v385 = vld [vmem:[%s4 + $0x30] sm:$0xff]
        %v386 = vld [vmem:[%s4 + $0x38] sm:$0xff]
        %v387 = vld [vmem:[%s4 + $0x40] sm:$0xff]
        %v388 = vld [vmem:[%s4 + $0x48] sm:$0xff]
        %v389 = vld [vmem:[%s4 + $0x50] sm:$0xff]
        %v390 = vld [vmem:[%s4 + $0x58] sm:$0xff]
        %v391 = vld [vmem:[%s4 + $0x60] sm:$0xff]
        %v392 = vld [vmem:[%s4 + $0x68] sm:$0xff]
        %v393 = vld [vmem:[%s4 + $0x70] sm:$0xff]
        %v394 = vld [vmem:[%s4 + $0x78] sm:$0xff]
        %v395 = vld [vmem:[%s0] sm:$0xff]
        %v396 = vld [vmem:[%s0 + $0x8] sm:$0xff]
        %v397 = vld [vmem:[%s2] sm:$0x1]
        %399 = vset.pattern.permute.xlu0 0
        %400 = vperm.xlu0 %399, %v363
        %v401 = vpop.permute.xlu0 %400
        %404 = vset.pattern.permute.xlu0 0
        %405 = vperm.xlu0 %404, %v364
        %v406 = vpop.permute.xlu0 %405
        %409 = vset.pattern.permute.xlu0 0
        %410 = vperm.xlu0 %409, %v365
        %v411 = vpop.permute.xlu0 %410
        %414 = vset.pattern.permute.xlu0 0
        %415 = vperm.xlu0 %414, %v366
        %v416 = vpop.permute.xlu0 %415
        %419 = vset.pattern.permute.xlu0 0
        %420 = vperm.xlu0 %419, %v367
        %v421 = vpop.permute.xlu0 %420
        %424 = vset.pattern.permute.xlu0 0
        %425 = vperm.xlu0 %424, %v368
        %v426 = vpop.permute.xlu0 %425
        %429 = vset.pattern.permute.xlu0 0
        %430 = vperm.xlu0 %429, %v369
        %v431 = vpop.permute.xlu0 %430
        %434 = vset.pattern.permute.xlu0 0
        %435 = vperm.xlu0 %434, %v370
        %v436 = vpop.permute.xlu0 %435
        %439 = vset.pattern.permute.xlu0 0
        %440 = vperm.xlu0 %439, %v371
        %v441 = vpop.permute.xlu0 %440
        %444 = vset.pattern.permute.xlu0 0
        %445 = vperm.xlu0 %444, %v372
        %v446 = vpop.permute.xlu0 %445
        %449 = vset.pattern.permute.xlu0 0
        %450 = vperm.xlu0 %449, %v373
        %v451 = vpop.permute.xlu0 %450
        %454 = vset.pattern.permute.xlu0 0
        %455 = vperm.xlu0 %454, %v374
        %v456 = vpop.permute.xlu0 %455
        %459 = vset.pattern.permute.xlu0 0
        %460 = vperm.xlu0 %459, %v375
        %v461 = vpop.permute.xlu0 %460
        %464 = vset.pattern.permute.xlu0 0
        %465 = vperm.xlu0 %464, %v376
        %v466 = vpop.permute.xlu0 %465
        %469 = vset.pattern.permute.xlu0 0
        %470 = vperm.xlu0 %469, %v377
        %v471 = vpop.permute.xlu0 %470
        %474 = vset.pattern.permute.xlu0 0
        %475 = vperm.xlu0 %474, %v378
        %v476 = vpop.permute.xlu0 %475
        %v478 = vperm.slane %v397, 0
        %v479 = vmul.f32 %v401, %v478
        %v480 = vmul.f32 %v406, %v478
        %v481 = vmul.f32 %v411, %v478
        %v482 = vmul.f32 %v416, %v478
        %v483 = vmul.f32 %v421, %v478
        %v484 = vmul.f32 %v426, %v478
        %v485 = vmul.f32 %v431, %v478
        %v486 = vmul.f32 %v436, %v478
        %v487 = vmul.f32 %v441, %v478
        %v488 = vmul.f32 %v446, %v478
        %v489 = vmul.f32 %v451, %v478
        %v490 = vmul.f32 %v456, %v478
        %v491 = vmul.f32 %v461, %v478
        %v492 = vmul.f32 %v466, %v478
        %v493 = vmul.f32 %v471, %v478
        %v494 = vmul.f32 %v476, %v478
        %v495 = vadd.f32 %v479, %v379
        %v496 = vadd.f32 %v480, %v380
        %v497 = vadd.f32 %v481, %v381
        %v498 = vadd.f32 %v482, %v382
        %v499 = vadd.f32 %v483, %v383
        %v500 = vadd.f32 %v484, %v384
        %v501 = vadd.f32 %v485, %v385
        %v502 = vadd.f32 %v486, %v386
        %v503 = vadd.f32 %v487, %v387
        %v504 = vadd.f32 %v488, %v388
        %v505 = vadd.f32 %v489, %v389
        %v506 = vadd.f32 %v490, %v390
        %v507 = vadd.f32 %v491, %v391
        %v508 = vadd.f32 %v492, %v392
        %v509 = vadd.f32 %v493, %v393
        %v510 = vadd.f32 %v494, %v394
        %v511 = vmax.f32 %v495, 0.0
        %v512 = vmax.f32 %v496, 0.0
        %v513 = vmax.f32 %v497, 0.0
        %v514 = vmax.f32 %v498, 0.0
        %v515 = vmax.f32 %v499, 0.0
        %v516 = vmax.f32 %v500, 0.0
        %v517 = vmax.f32 %v501, 0.0
        %v518 = vmax.f32 %v502, 0.0
        %v519 = vmax.f32 %v503, 0.0
        %v520 = vmax.f32 %v504, 0.0
        %v521 = vmax.f32 %v505, 0.0
        %v522 = vmax.f32 %v506, 0.0
        %v523 = vmax.f32 %v507, 0.0
        %v524 = vmax.f32 %v508, 0.0
        %v525 = vmax.f32 %v509, 0.0
        %v526 = vmax.f32 %v510, 0.0
        %527 = vmatpush.msra.mxu0 %v526
        %528 = vmatpush.msra.mxu0 %v525
        %529 = vmatpush.msra.mxu0 %v524
        %530 = vmatpush.msra.mxu0 %v523
        %531 = vmatpush.msra.mxu0 %v522
        %532 = vmatpush.msra.mxu0 %v521
        %533 = vmatpush.msra.mxu0 %v520
        %534 = vmatpush.msra.mxu0 %v519
        %535 = vmatpush.msra.mxu0 %v518
        %536 = vmatpush.msra.mxu0 %v517
        %537 = vmatpush.msra.mxu0 %v516
        %538 = vmatpush.msra.mxu0 %v515
        %539 = vmatpush.msra.mxu0 %v514
        %540 = vmatpush.msra.mxu0 %v513
        %541 = vmatpush.msra.mxu0 %v512
        %542 = vmatpush.msra.mxu0 %v511
        %543 = vmatmul.f32.gmra.mxu0 %v395
        %v544 = vpop.f32.mrf.mxu0
        %v545 = vadd.f32 0.0, %v544
        %546 = vmatmul.f32.gmra.mxu0 %v396
        %v547 = vpop.f32.mrf.mxu0
        %v548 = vadd.f32 0.0, %v547
        %549 = vdwg.mxu0
        %v550 = vld [vmem:[%s1] sm:$0xff]
        %v551 = vld [vmem:[%s1 + $0x8] sm:$0xff]
        %553 = vset.pattern.permute.xlu0 0
        %554 = vperm.xlu0 %553, %v550
        %v555 = vpop.permute.xlu0 %554
        %558 = vset.pattern.permute.xlu0 0
        %559 = vperm.xlu0 %558, %v551
        %v560 = vpop.permute.xlu0 %559
        %v562 = vmul.f32 %v555, %v545
        %v563 = vmul.f32 %v560, %v548
        %v564 = vadd.f32 %v562, 0.0
        %v565 = vadd.f32 %v563, 0.0
        %v566 = vld [vmem:[%s2 + $0x1] sm:$0x1]
        %v567 = vperm.slane %v566, 0
        %v568 = vmul.f32 %v401, %v567
        %v569 = vmul.f32 %v406, %v567
        %v570 = vmul.f32 %v411, %v567
        %v571 = vmul.f32 %v416, %v567
        %v572 = vmul.f32 %v421, %v567
        %v573 = vmul.f32 %v426, %v567
        %v574 = vmul.f32 %v431, %v567
        %v575 = vmul.f32 %v436, %v567
        %v576 = vmul.f32 %v441, %v567
        %v577 = vmul.f32 %v446, %v567
        %v578 = vmul.f32 %v451, %v567
        %v579 = vmul.f32 %v456, %v567
        %v580 = vmul.f32 %v461, %v567
        %v581 = vmul.f32 %v466, %v567
        %v582 = vmul.f32 %v471, %v567
        %v583 = vmul.f32 %v476, %v567
        %v584 = vadd.f32 %v568, %v379
        %v585 = vadd.f32 %v569, %v380
        %v586 = vadd.f32 %v570, %v381
        %v587 = vadd.f32 %v571, %v382
        %v588 = vadd.f32 %v572, %v383
        %v589 = vadd.f32 %v573, %v384
        %v590 = vadd.f32 %v574, %v385
        %v591 = vadd.f32 %v575, %v386
        %v592 = vadd.f32 %v576, %v387
        %v593 = vadd.f32 %v577, %v388
        %v594 = vadd.f32 %v578, %v389
        %v595 = vadd.f32 %v579, %v390
        %v596 = vadd.f32 %v580, %v391
        %v597 = vadd.f32 %v581, %v392
        %v598 = vadd.f32 %v582, %v393
        %v599 = vadd.f32 %v583, %v394
        %v600 = vmax.f32 %v584, 0.0
        %v601 = vmax.f32 %v585, 0.0
        %v602 = vmax.f32 %v586, 0.0
        %v603 = vmax.f32 %v587, 0.0
        %v604 = vmax.f32 %v588, 0.0
        %v605 = vmax.f32 %v589, 0.0
        %v606 = vmax.f32 %v590, 0.0
        %v607 = vmax.f32 %v591, 0.0
        %v608 = vmax.f32 %v592, 0.0
        %v609 = vmax.f32 %v593, 0.0
        %v610 = vmax.f32 %v594, 0.0
        %v611 = vmax.f32 %v595, 0.0
        %v612 = vmax.f32 %v596, 0.0
        %v613 = vmax.f32 %v597, 0.0
        %v614 = vmax.f32 %v598, 0.0
        %v615 = vmax.f32 %v599, 0.0
        %616 = vmatpush.msra.mxu0 %v615
        %617 = vmatpush.msra.mxu0 %v614
        %618 = vmatpush.msra.mxu0 %v613
        %619 = vmatpush.msra.mxu0 %v612
        %620 = vmatpush.msra.mxu0 %v611
        %621 = vmatpush.msra.mxu0 %v610
        %622 = vmatpush.msra.mxu0 %v609
        %623 = vmatpush.msra.mxu0 %v608
        %624 = vmatpush.msra.mxu0 %v607
        %625 = vmatpush.msra.mxu0 %v606
        %626 = vmatpush.msra.mxu0 %v605
        %627 = vmatpush.msra.mxu0 %v604
        %628 = vmatpush.msra.mxu0 %v603
        %629 = vmatpush.msra.mxu0 %v602
        %630 = vmatpush.msra.mxu0 %v601
        %631 = vmatpush.msra.mxu0 %v600
        %632 = vmatmul.f32.gmra.mxu0 %v395
        %v633 = vpop.f32.mrf.mxu0
        %v634 = vadd.f32 0.0, %v633
        %635 = vmatmul.f32.gmra.mxu0 %v396
        %v636 = vpop.f32.mrf.mxu0
        %v637 = vadd.f32 0.0, %v636
        %638 = vdwg.mxu0
        %s639 = scalar_lea.vmem %s1, 16
        %v640 = vld [vmem:[%s639] sm:$0xff]
        %v641 = vld [vmem:[%s639 + $0x8] sm:$0xff]
        %643 = vset.pattern.permute.xlu0 0
        %644 = vperm.xlu0 %643, %v640
        %v645 = vpop.permute.xlu0 %644
        %648 = vset.pattern.permute.xlu0 0
        %649 = vperm.xlu0 %648, %v641
        %v650 = vpop.permute.xlu0 %649
        %v652 = vmul.f32 %v645, %v634
        %v653 = vmul.f32 %v650, %v637
        %v654 = vadd.f32 %v564, %v652
        %v655 = vadd.f32 %v565, %v653
        %656 = vst [vmem:[#allocation2] sm:$0xff] %v654
        %657 = vst [vmem:[#allocation2 + $0x8] sm:$0xff] %v655
      $region64: #{net2_forward.1} parent=59 // pred_fallthru
        _
      %v658 = vld [vmem:[%s355] sm:$0xff]
      %v659 = vld [vmem:[%s355 + $0x8] sm:$0xff]
      %v660 = vld [vmem:[%s355 + $0x10] sm:$0xff]
      %v661 = vld [vmem:[%s355 + $0x18] sm:$0xff]
      %v662 = vld [vmem:[%s355 + $0x20] sm:$0xff]
      %v663 = vld [vmem:[%s355 + $0x28] sm:$0xff]
      %v664 = vld [vmem:[%s355 + $0x30] sm:$0xff]
      %v665 = vld [vmem:[%s355 + $0x38] sm:$0xff]
      %v666 = vld [vmem:[%s355 + $0x40] sm:$0xff]
      %v667 = vld [vmem:[%s355 + $0x48] sm:$0xff]
      %v668 = vld [vmem:[%s355 + $0x50] sm:$0xff]
      %v669 = vld [vmem:[%s355 + $0x58] sm:$0xff]
      %v670 = vld [vmem:[%s355 + $0x60] sm:$0xff]
      %v671 = vld [vmem:[%s355 + $0x68] sm:$0xff]
      %v672 = vld [vmem:[%s355 + $0x70] sm:$0xff]
      %v673 = vld [vmem:[%s355 + $0x78] sm:$0xff]
      %v674 = vld [vmem:[%s358] sm:$0x1]
      %v675 = vld [vmem:[#allocation2] sm:$0xff]
      %v676 = vld [vmem:[#allocation2 + $0x8] sm:$0xff]
      %677 = vmatpush.msra.mxu0 %v673
      %678 = vmatpush.msra.mxu0 %v672
      %679 = vmatpush.msra.mxu0 %v671
      %680 = vmatpush.msra.mxu0 %v670
      %681 = vmatpush.msra.mxu0 %v669
      %682 = vmatpush.msra.mxu0 %v668
      %683 = vmatpush.msra.mxu0 %v667
      %684 = vmatpush.msra.mxu0 %v666
      %685 = vmatpush.msra.mxu0 %v665
      %686 = vmatpush.msra.mxu0 %v664
      %687 = vmatpush.msra.mxu0 %v663
      %688 = vmatpush.msra.mxu0 %v662
      %689 = vmatpush.msra.mxu0 %v661
      %690 = vmatpush.msra.mxu0 %v660
      %691 = vmatpush.msra.mxu0 %v659
      %692 = vmatpush.msra.mxu0 %v658
      %693 = vmatmul.f32.gmra.mxu0 %v675
      %v694 = vpop.f32.mrf.mxu0
      %v695 = vadd.f32 0.0, %v694
      %696 = vmatmul.f32.gmra.mxu0 %v676
      %v697 = vpop.f32.mrf.mxu0
      %v698 = vadd.f32 0.0, %v697
      %699 = vdwg.mxu0
      %v700 = vld [vmem:[%s5] sm:$0xff]
      %v701 = vld [vmem:[%s5 + $0x8] sm:$0xff]
      %v703 = vperm.slane %v674, 0
      %vm705 = vcmask 130048
      %v707 = vsel %vm705, %v700, 0
      %v710 = vsel %vm705, %v701, 0
      %712 = vmatpush.msra.mxu0 0.0
      %713 = vmatpush.msra.mxu0 0.0
      %714 = vmatpush.msra.mxu0 0.0
      %715 = vmatpush.msra.mxu0 0.0
      %716 = vmatpush.msra.mxu0 0.0
      %717 = vmatpush.msra.mxu0 0.0
      %718 = vmatpush.msra.mxu0 0.0
      %719 = vmatpush.msra.mxu0 0.0
      %720 = vmatpush.msra.mxu0 0.0
      %721 = vmatpush.msra.mxu0 0.0
      %722 = vmatpush.msra.mxu0 0.0
      %723 = vmatpush.msra.mxu0 0.0
      %724 = vmatpush.msra.mxu0 0.0
      %725 = vmatpush.msra.mxu0 0.0
      %726 = vmatpush.msra.mxu0 %v698
      %727 = vmatpush.msra.mxu0 %v695
      %728 = vmatmul.f32.gmra.mxu0 %v707
      %v729 = vpop.f32.mrf.mxu0
      %v730 = vadd.f32 %v703, %v729
      %731 = vmatmul.f32.gmra.mxu0 %v710
      %v732 = vpop.f32.mrf.mxu0
      %v733 = vadd.f32 %v703, %v732
      %734 = vdwg.mxu0
      %v735 = vmax.f32 %v730, 0.0
      %v736 = vmax.f32 %v733, 0.0
      %737 = vst [vmem:[#allocation2] sm:$0xff] %v735
      %738 = vst [vmem:[#allocation2 + $0x8] sm:$0xff] %v736
      %p739 = scmp.eq.s32.totalorder %s21, 1
      // Predicated region
      $region65: #{net2_forward.1} parent=59 // pred_check
        %p740 = pneg %p739
      $region66: #{net2_forward.1} parent=59 // pred_check_branch
        %742 = sbr.rel (%p740) target = $region68
      $region67: #{net2_forward.1} parent=59 // pred_region
        %v743 = vld [vmem:[#allocation2] sm:$0xff]
        %v744 = vld [vmem:[#allocation2 + $0x8] sm:$0xff]
        %v745 = vld [vmem:[%s8] sm:$0xff]
        %v746 = vld [vmem:[%s8 + $0x8] sm:$0xff]
        %v747 = vld [vmem:[%s8 + $0x10] sm:$0xff]
        %v748 = vld [vmem:[%s8 + $0x18] sm:$0xff]
        %v749 = vld [vmem:[%s8 + $0x20] sm:$0xff]
        %v750 = vld [vmem:[%s8 + $0x28] sm:$0xff]
        %v751 = vld [vmem:[%s8 + $0x30] sm:$0xff]
        %v752 = vld [vmem:[%s8 + $0x38] sm:$0xff]
        %v753 = vld [vmem:[%s8 + $0x40] sm:$0xff]
        %v754 = vld [vmem:[%s8 + $0x48] sm:$0xff]
        %v755 = vld [vmem:[%s8 + $0x50] sm:$0xff]
        %v756 = vld [vmem:[%s8 + $0x58] sm:$0xff]
        %v757 = vld [vmem:[%s8 + $0x60] sm:$0xff]
        %v758 = vld [vmem:[%s8 + $0x68] sm:$0xff]
        %v759 = vld [vmem:[%s8 + $0x70] sm:$0xff]
        %v760 = vld [vmem:[%s8 + $0x78] sm:$0xff]
        %v761 = vld [vmem:[%s9] sm:$0x1]
        %v763 = vperm.slane %v761, 0
        %765 = vmatpush.msra.mxu0 %v760
        %766 = vmatpush.msra.mxu0 %v759
        %767 = vmatpush.msra.mxu0 %v758
        %768 = vmatpush.msra.mxu0 %v757
        %769 = vmatpush.msra.mxu0 %v756
        %770 = vmatpush.msra.mxu0 %v755
        %771 = vmatpush.msra.mxu0 %v754
        %772 = vmatpush.msra.mxu0 %v753
        %773 = vmatpush.msra.mxu0 %v752
        %774 = vmatpush.msra.mxu0 %v751
        %775 = vmatpush.msra.mxu0 %v750
        %776 = vmatpush.msra.mxu0 %v749
        %777 = vmatpush.msra.mxu0 %v748
        %778 = vmatpush.msra.mxu0 %v747
        %779 = vmatpush.msra.mxu0 %v746
        %780 = vmatpush.msra.mxu0 %v745
        %781 = vmatmul.f32.gmra.mxu0 %v743
        %v782 = vpop.f32.mrf.mxu0
        %v783 = vadd.f32 %v763, %v782
        %784 = vmatmul.f32.gmra.mxu0 %v744
        %v785 = vpop.f32.mrf.mxu0
        %v786 = vadd.f32 %v763, %v785
        %787 = vdwg.mxu0
        %788 = vmax.xlane.f32.xlu0 %v783
        %v789 = vpop.xlane.xlu0 %788
        %790 = vmax.xlane.f32.xlu0 %v786
        %v791 = vpop.xlane.xlu0 %790
        %v792 = vsub.f32 %v783, %v789
        %v793 = vsub.f32 %v786, %v791
        %v794 = vmul.f32 %v792, 1.442695
        %v795 = vpow.pop %v794
        %v796 = vmul.f32 %v793, 1.442695
        %v797 = vpow.pop %v796
        %798 = vadd.xlane.f32.xlu0 %v795
        %v799 = vpop.xlane.xlu0 %798
        %800 = vadd.xlane.f32.xlu0 %v797
        %v801 = vpop.xlane.xlu0 %800
        %v802 = vlog2.pop %v799
        %v803 = vmul.f32 %v802, 0.6931472
        %v804 = vlog2.pop %v801
        %v805 = vmul.f32 %v804, 0.6931472
        %v806 = vadd.f32 %v803, %v789
        %v807 = vadd.f32 %v805, %v791
        %v808 = vsub.f32 %v783, %v806
        %v809 = vsub.f32 %v786, %v807
        %810 = vst [vmem:[%s10] sm:$0xff] %v808
        %811 = vst [vmem:[%s10 + $0x8] sm:$0xff] %v809
      $region68: #{net2_forward.1} parent=59 // pred_fallthru
        _
      // Predicated region
      $region69: #{net2_forward.1} parent=59 // pred_check
        %p812 = pneg %p254
      $region70: #{net2_forward.1} parent=59 // pred_check_branch
        %814 = sbr.rel (%p812) target = $region72
      $region71: #{net2_forward.1} parent=59 // pred_region
        _
      $region72: #{net2_forward.1} parent=59 // pred_fallthru
        _
      // Predicated region
      $region73: #{net2_forward.1} parent=59 // pred_check
        %p815 = pneg %p254
      $region74: #{net2_forward.1} parent=59 // pred_check_branch
        %817 = sbr.rel (%p815) target = $region76
      $region75: #{net2_forward.1} parent=59 // pred_region
        _
      $region76: #{net2_forward.1} parent=59 // pred_fallthru
        _
    $region60: #{net2_forward.1} parent=5 // pred_fallthru
      _
    %p818 = scmp.le.s32.totalorder 2, %s16
    // Predicated region
    $region77: #{net2_forward.1} parent=5 // pred_check
      %p819 = pneg %p818
    $region78: #{net2_forward.1} parent=5 // pred_check_branch
      %821 = sbr.rel (%p819) target = $region80
    $region79: #{net2_forward.1} parent=5 // pred_region
      %s822 = ssub.s32 %s16, 2
    $region80: #{net2_forward.1} parent=5 // pred_fallthru
      _
  $region6: #{net2_forward.1} parent=0 // loop_footer
    %s20 = sadd.s32 1, %s16
  $region7: #{net2_forward.1} parent=0 // loop_footer_branch
    %15 = sbr.rel target = $region3
  $region8: #{net2_forward.1} parent=0 // loop_exit
    _

</llo_original>
